<compile_context>
chip_gen: v6e
topology: v6e:2x2x1
jax: 0.10.0
libtpu: 0.0.40
codegen_flags: <defaults>
</compile_context>

<pallas_src>
import functools

import jax
import jax.numpy as jnp
from jax.experimental import pallas as pl
from jax.experimental.pallas import tpu as pltpu

_LANE = 128
_VMEM_LIMIT = 32 * 1024 * 1024  # bytes; well under physical VMEM on v5e/v6e/v7x


def _round_up(v, m):
    return (v + m - 1) // m * m


def _feat_transform_kernel(x_ref, w_ref, z_ref):
    """z = x @ W1 (no bias / relu; they are applied in the layer-1 epilogue)."""
    z_ref[...] = jnp.dot(x_ref[...], w_ref[...],
                         preferred_element_type=jnp.float32).astype(z_ref.dtype)


def _gin_layer1_kernel(adj_ref, z_ref, zrow_ref, b1_ref, h1_ref, acc_ref):
    """h1 = relu(A^T z + z + b1) for one row tile, reduced over k tiles (z = x @ W1)."""
    k = pl.program_id(1)

    @pl.when(k == 0)
    def _():
        acc_ref[...] = jnp.zeros_like(acc_ref)

    # adj_ref holds int8 block (k, i) of A; widen to the compute dtype on the VPU and
    # contract its dim 0 against z's dim 0 => A^T @ z without materializing A^T.
    acc_ref[...] += jax.lax.dot_general(
        adj_ref[...].astype(z_ref.dtype), z_ref[...],
        dimension_numbers=(((0,), (0,)), ((), ())),
        preferred_element_type=jnp.float32)

    @pl.when(k == pl.num_programs(1) - 1)
    def _():
        # self-loop term (the "+ I") added here; zrow block index is constant in k so
        # it is DMA'd once per row tile and stays resident.
        h1 = acc_ref[...] + zrow_ref[...].astype(jnp.float32) + b1_ref[...]
        # inner ReLU (Sequential) and outer F.relu are idempotent -> single max
        h1_ref[...] = jnp.maximum(h1, 0.0).astype(h1_ref.dtype)
        # TODO(synk): training-mode dropout (identity in eval mode)


def _gin_layer2_kernel(adj_ref, h_ref, hrow_ref, w2_ref, b2_ref, w3_ref, b3_ref,
                       out_ref, acc_ref, *, nclass):
    """out = log_softmax(relu((A^T h1 + h1) @ W2 + b2) @ W3 + b3) for one row tile."""
    k = pl.program_id(1)

    @pl.when(k == 0)
    def _():
        acc_ref[...] = jnp.zeros_like(acc_ref)

    acc_ref[...] += jax.lax.dot_general(
        adj_ref[...].astype(h_ref.dtype), h_ref[...],
        dimension_numbers=(((0,), (0,)), ((), ())),
        preferred_element_type=jnp.float32)

    @pl.when(k == pl.num_programs(1) - 1)
    def _():
        agg = acc_ref[...] + hrow_ref[...].astype(jnp.float32)   # self-loop
        h2 = jnp.maximum(
            jnp.dot(agg.astype(w2_ref.dtype), w2_ref[...],
                    preferred_element_type=jnp.float32) + b2_ref[...], 0.0)
        logits = jnp.dot(h2.astype(w3_ref.dtype), w3_ref[...],
                         preferred_element_type=jnp.float32) + b3_ref[...]
        # mask padded class lanes (kept in f32 — bf16 would overflow on the -1e30 mask)
        lane = jax.lax.broadcasted_iota(jnp.int32, logits.shape, 1)
        logits = jnp.where(lane < nclass, logits, -1e30)
        m = jnp.max(logits, axis=1, keepdims=True)
        shifted = logits - m
        lse = jnp.log(jnp.sum(jnp.exp(shifted), axis=1, keepdims=True))
        out_ref[...] = shifted - lse


def gin_forward(x, adj, params, *, block_m=1024, block_k=1024,
                compute_dtype=jnp.bfloat16):
    """GIN forward. x: (N, nfeat) f32, adj: (N, N) dense 0/1 adjacency, params: dict."""
    assert block_m % _LANE == 0 and block_k % _LANE == 0
    N, nfeat = x.shape
    nhid = params["w1"].shape[1]
    nclass = params["w3"].shape[1]

    fp = _round_up(nfeat, _LANE)
    hp = _round_up(nhid, _LANE)
    cp = _round_up(nclass, _LANE)

    n128 = _round_up(N, _LANE)
    bm = min(block_m, n128)
    # ensure >= 2 row tiles where possible so the "parallel" axis can feed both v7x TCs
    if n128 // bm < 2 and n128 >= 2 * _LANE:
        bm = _round_up(n128 // 2, _LANE)
    bk = min(block_k, n128)
    # keep bm | bk or bk | bm so the node padding is max(bm, bk), never a large lcm
    if bk >= bm:
        bk = (bk // bm) * bm
    else:
        while bm % bk != 0:
            bk -= _LANE
    npad = _round_up(N, max(bm, bk))

    cdt = compute_dtype
    # Adjacency stored as int8 (exact for 0/1): half the HBM bytes of bf16 on the
    # dominant stream. No (A + I) / A^T copy is ever written to HBM — the self-loop
    # lives in the kernel epilogues and the transpose in the adjacency index_map.
    adj_i8 = jnp.pad(adj, ((0, npad - N), (0, npad - N))).astype(jnp.int8)
    x_p = jnp.pad(x, ((0, npad - N), (0, fp - nfeat))).astype(cdt)
    w1 = jnp.pad(params["w1"], ((0, fp - nfeat), (0, hp - nhid))).astype(cdt)
    w2 = jnp.pad(params["w2"], ((0, hp - nhid), (0, hp - nhid))).astype(cdt)
    w3 = jnp.pad(params["w3"], ((0, hp - nhid), (0, cp - nclass))).astype(cdt)
    b1 = jnp.pad(params["b1"], ((0, 0), (0, hp - nhid)))
    b2 = jnp.pad(params["b2"], ((0, 0), (0, hp - nhid)))
    b3 = jnp.pad(params["b3"], ((0, 0), (0, cp - nclass)))

    grid = (npad // bm, npad // bk)
    cparams = pltpu.CompilerParams(
        dimension_semantics=("parallel", "arbitrary"),
        vmem_limit_bytes=_VMEM_LIMIT)
    cparams_1d = pltpu.CompilerParams(
        dimension_semantics=("parallel",),
        vmem_limit_bytes=_VMEM_LIMIT)

    # adjacency block (k, i): streamed int8 column-block of A, transpose folded in.
    adj_spec = pl.BlockSpec((bk, bm), lambda i, k: (k, i))

    # --- pass 0: feature transform z = x @ W1 (associativity: (A+I)^T x W1 = A^T z + z)
    # Aggregation width drops from fp to hp (typically nfeat >> nhid on GNN datasets).
    # TODO(synk): tile the fp contraction if nfeat gets extremely wide (>~4k lanes).
    z = pl.pallas_call(
        _feat_transform_kernel,
        out_shape=jax.ShapeDtypeStruct((npad, hp), cdt),
        grid_spec=pltpu.PrefetchScalarGridSpec(
            num_scalar_prefetch=0,
            grid=(npad // bm,),
            in_specs=[
                pl.BlockSpec((bm, fp), lambda i: (i, 0)),
                pl.BlockSpec((fp, hp), lambda i: (0, 0)),
            ],
            out_specs=pl.BlockSpec((bm, hp), lambda i: (i, 0))),
        compiler_params=cparams_1d,
    )(x_p, w1)

    # --- pass 1: GINConv 1 -> h1 = relu(A^T z + z + b1), lane-dense compute_dtype ---
    h1 = pl.pallas_call(
        _gin_layer1_kernel,
        out_shape=jax.ShapeDtypeStruct((npad, hp), cdt),
        grid_spec=pltpu.PrefetchScalarGridSpec(
            num_scalar_prefetch=0,
            grid=grid,
            in_specs=[
                adj_spec,
                pl.BlockSpec((bk, hp), lambda i, k: (k, 0)),   # z rows (source nodes)
                pl.BlockSpec((bm, hp), lambda i, k: (i, 0)),   # z row tile (self-loop)
                pl.BlockSpec((1, hp), lambda i, k: (0, 0)),    # b1
            ],
            out_specs=pl.BlockSpec((bm, hp), lambda i, k: (i, 0)),
            scratch_shapes=[pltpu.VMEM((bm, hp), jnp.float32)]),
        compiler_params=cparams,
    )(adj_i8, z, z, b1)

    # --- pass 2: GINConv 2 + classifier + log_softmax ---
    # NOTE: padded rows of h1 equal relu(b1) (nonzero) but padded adjacency
    # rows/columns are zero, so they never contaminate real rows; result is sliced.
    out_p = pl.pallas_call(
        functools.partial(_gin_layer2_kernel, nclass=nclass),
        out_shape=jax.ShapeDtypeStruct((npad, cp), jnp.float32),
        grid_spec=pltpu.PrefetchScalarGridSpec(
            num_scalar_prefetch=0,
            grid=grid,
            in_specs=[
                adj_spec,
                pl.BlockSpec((bk, hp), lambda i, k: (k, 0)),   # h1 rows (source nodes)
                pl.BlockSpec((bm, hp), lambda i, k: (i, 0)),   # h1 row tile (self-loop)
                pl.BlockSpec((hp, hp), lambda i, k: (0, 0)),   # W2 (VMEM-resident)
                pl.BlockSpec((1, hp), lambda i, k: (0, 0)),    # b2
                pl.BlockSpec((hp, cp), lambda i, k: (0, 0)),   # W3
                pl.BlockSpec((1, cp), lambda i, k: (0, 0)),    # b3
            ],
            out_specs=pl.BlockSpec((bm, cp), lambda i, k: (i, 0)),
            scratch_shapes=[pltpu.VMEM((bm, hp), jnp.float32)]),
        compiler_params=cparams,
    )(adj_i8, h1, h1, w2, b2, w3, b3)

    return out_p[:N, :nclass]


def init_params(key, nfeat, nhid, nclass):
    ks = jax.random.split(key, 6)
    # weights stored pre-transposed as (in, out) so y = h @ W + b
    w1 = jax.random.normal(ks[0], (nfeat, nhid), jnp.float32) / jnp.sqrt(nfeat)
    b1 = jax.random.normal(ks[1], (1, nhid), jnp.float32) * 0.01
    w2 = jax.random.normal(ks[2], (nhid, nhid), jnp.float32) / jnp.sqrt(nhid)
    b2 = jax.random.normal(ks[3], (1, nhid), jnp.float32) * 0.01
    w3 = jax.random.normal(ks[4], (nhid, nclass), jnp.float32) / jnp.sqrt(nhid)
    b3 = jax.random.normal(ks[5], (1, nclass), jnp.float32) * 0.01
    return {"w1": w1, "b1": b1, "w2": w2, "b2": b2, "w3": w3, "b3": b3}


def reference_forward_f32(x, adj, p):
    """Pure-f32 reference with the original PyTorch eval-mode semantics."""
    adj_t = adj.T
    agg1 = x + adj_t @ x
    h1 = jnp.maximum(agg1 @ p["w1"] + p["b1"], 0.0)
    agg2 = h1 + adj_t @ h1
    h2 = jnp.maximum(agg2 @ p["w2"] + p["b2"], 0.0)
    return jax.nn.log_softmax(h2 @ p["w3"] + p["b3"], axis=1)


def reference_forward_mixed(x, adj, p):
    """Same op graph with the kernel's bf16-input / f32-accumulate matmul order."""
    bf, f32 = jnp.bfloat16, jnp.float32
    a = adj.astype(bf)                                    # 0/1: exact (matches int8 path)
    z = jnp.dot(x.astype(bf), p["w1"].astype(bf),
                preferred_element_type=f32).astype(bf)
    h1 = jnp.maximum(jnp.dot(a.T, z, preferred_element_type=f32)
                     + z.astype(f32) + p["b1"], 0.0).astype(bf)
    agg2 = jnp.dot(a.T, h1, preferred_element_type=f32) + h1.astype(f32)
    h2 = jnp.maximum(jnp.dot(agg2.astype(bf), p["w2"].astype(bf),
                             preferred_element_type=f32) + p["b2"], 0.0)
    logits = jnp.dot(h2.astype(bf), p["w3"].astype(bf),
                     preferred_element_type=f32) + p["b3"]
    return jax.nn.log_softmax(logits, axis=1)


if __name__ == "__main__":
    N, nfeat, nhid, nclass = 32, 16, 32, 8

    key = jax.random.PRNGKey(0)
    k_x, k_adj, k_p = jax.random.split(key, 3)

    x = jax.random.normal(k_x, (N, nfeat), jnp.float32)

    # random symmetric binary adjacency (no self loops); GINConv adds the self term
    # itself (eps=0) and ignores edge weights.
    a = (jax.random.uniform(k_adj, (N, N)) < 0.15).astype(jnp.float32)
    adj = jnp.clip(a + a.T, 0.0, 1.0) * (1.0 - jnp.eye(N, dtype=jnp.float32))

    params = init_params(k_p, nfeat, nhid, nclass)

    # default bf16-aggregation path vs a precision-matched JAX reference
    out = jax.block_until_ready(gin_forward(x, adj, params))
    assert out.shape == (N, nclass)
    assert bool(jnp.all(jnp.isfinite(out)))
    # each row is a valid log-probability distribution
    assert bool(jnp.allclose(jax.scipy.special.logsumexp(out, axis=1), 0.0, atol=1e-3))
    ref_mixed = reference_forward_mixed(x, adj, params)
    # tolerance covers bf16 double-rounding of independently f32-accumulated
    # intermediates (typical agreement is ~1e-5)
    assert bool(jnp.allclose(out, ref_mixed, atol=3e-2, rtol=3e-2)), \
        float(jnp.max(jnp.abs(out - ref_mixed)))

    # exact-precision path matches the pure-f32 PyTorch eval-mode semantics tightly
    # (tolerance covers the (A^T x)W1 vs A^T(xW1) associativity reordering)
    out_f32 = jax.block_until_ready(
        gin_forward(x, adj, params, compute_dtype=jnp.float32))
    ref_f32 = reference_forward_f32(x, adj, params)
    assert bool(jnp.allclose(out_f32, ref_f32, atol=1e-3, rtol=1e-3)), \
        float(jnp.max(jnp.abs(out_f32 - ref_f32)))

    print("KERNEL_OK")
</pallas_src>

<mosaic_0001>
module attributes {stable_mosaic.version = 11 : i64} {
  func.func @_feat_transform_kernel(%arg0: i32, %arg1: memref<128x128xbf16, #tpu.memory_space<vmem>>, %arg2: memref<128x128xbf16, #tpu.memory_space<vmem>>, %arg3: memref<128x128xbf16, #tpu.memory_space<vmem>>) attributes {dimension_semantics = [#tpu.dimension_semantics<parallel>], iteration_bounds = array<i64: 1>, scalar_prefetch = 0 : i64, scratch_operands = 0 : i64, tpu.core_type = #tpu.core_type<tc>, window_params = [{transform_indices = @transform_0, window_bounds = array<i64: 128, 128>}, {pipeline_mode = #tpu.pipeline_mode<synchronous>, transform_indices = @transform_1, window_bounds = array<i64: 128, 128>}, {transform_indices = @transform_2, window_bounds = array<i64: 128, 128>}]} {
    %c0 = arith.constant 0 : index
    %c0_0 = arith.constant 0 : index
    %0 = vector.load %arg1[%c0, %c0_0] : memref<128x128xbf16, #tpu.memory_space<vmem>>, vector<128x128xbf16>
    %c0_1 = arith.constant 0 : index
    %c0_2 = arith.constant 0 : index
    %1 = vector.load %arg2[%c0_1, %c0_2] : memref<128x128xbf16, #tpu.memory_space<vmem>>, vector<128x128xbf16>
    %cst = arith.constant dense<0.000000e+00> : vector<128x128xf32>
    %2 = tpu.matmul %0, %1, %cst {dimension_numbers = #tpu.dot_dimension_numbers<[1], [0], [0], [1], [0, 0, 1, 1], [], []>} : vector<128x128xbf16>, vector<128x128xbf16>, vector<128x128xf32> -> vector<128x128xf32>
    %3 = arith.truncf %2 : vector<128x128xf32> to vector<128x128xbf16>
    %c0_3 = arith.constant 0 : index
    %c0_4 = arith.constant 0 : index
    %4 = vector.load %arg3[%c0_3, %c0_4] : memref<128x128xbf16, #tpu.memory_space<vmem>>, vector<128x128xbf16>
    tpu.vector_store %arg3[%c0_3, %c0_4], %3 {strides = array<i32>} : memref<128x128xbf16, #tpu.memory_space<vmem>>, vector<128x128xbf16>,
    return
  }
  func.func @transform_0(%arg0: i32) -> (i32, i32) {
    %c0_i32 = arith.constant 0 : i32
    %c0_i32_0 = arith.constant 0 : i32
    return %arg0, %c0_i32 : i32, i32
  }
  func.func @transform_1(%arg0: i32) -> (i32, i32) {
    %c0_i32 = arith.constant 0 : i32
    %c0_i32_0 = arith.constant 0 : i32
    %c0_i32_1 = arith.constant 0 : i32
    return %c0_i32, %c0_i32_0 : i32, i32
  }
  func.func @transform_2(%arg0: i32) -> (i32, i32) {
    %c0_i32 = arith.constant 0 : i32
    %c0_i32_0 = arith.constant 0 : i32
    return %arg0, %c0_i32 : i32, i32
  }
}

</mosaic_0001>

<llo_original>
// kernel: tpu_custom_call.1
$region0: #{tpu_custom_call.1}
  #allocation0 [shape = 'u32[]', space=smem, size = 0x4, offset = 0x4, fixed_abs, tag = 'smem constant byte address 0x4 - core index']
  #allocation1 [shape = 'u32[144,128]{1,0:T(1,128)}', space=vmem, size = 0x12000, scoped, tag = 'internal scratch']
  %s0 = inlined_call_operand.hbm [shape: bf16[128,128], index: 0, kind: input, shape index: {}]
  %s1 = inlined_call_operand.hbm [shape: bf16[128,128], index: 1, kind: input, shape index: {}]
  %s2 = inlined_call_operand.hbm [shape: bf16[128,128], index: 2, kind: output, shape index: {}]
  %s3 = sld [smem:[#allocation0]]
  $region26: #{tpu_custom_call.1} parent=0
    _
  %s5 = ssub.s32 1, %s3
  %s6 = scalar_select 0, %s5, %s3
  $region1: #{tpu_custom_call.1} parent=0
    #allocation2 [shape = 'u8[32768]{0}', space=vmem, size = 0x8000, scoped, tag = 'input window, operand 0, single buffered']
    #allocation3 [shape = 's32[1]{0}', space=sflag, size = 0x4, scoped, tag = 'scoped memory for tpu_custom_call.1']
    #allocation4 [shape = 's32[1]{0}', space=sflag, size = 0x4, scoped, tag = 'scoped memory for tpu_custom_call.1']
    #allocation5 [shape = 'u8[32768]{0}', space=vmem, size = 0x8000, scoped, tag = 'input window, operand 1, single buffered']
    #allocation6 [shape = 's32[1]{0}', space=sflag, size = 0x4, scoped, tag = 'scoped memory for tpu_custom_call.1']
    #allocation7 [shape = 'u8[32768]{0}', space=vmem, size = 0x8000, scoped, tag = 'output window, operand 0, single buffered']
    %7 = vsyncpa [#allocation3], 0
    %8 = vsyncpa [#allocation6], 0
    %9 = vsyncpa [#allocation4], 0
    // Predicated region
    $region2: #{tpu_custom_call.1} parent=1 // pred_check
      _
    $region3: #{tpu_custom_call.1} parent=1 // pred_check_branch
      %11 = sbr.rel (0) target = $region5
    $region4: #{tpu_custom_call.1} parent=1 // pred_region
      %s13 = ssub.s32 1024, 1024
      %14 = vsyncadd [#allocation3], %s13
      %s15 = sshll.u32 [#allocation2], 4
      %s16 = int_to_ptr.vmem [resolvable:$true] %s15
      %21 = dma.hbm_to_vmem [thread:$0]  %s0, 1024, %s16, [#allocation3], 64, 64, 4
    $region5: #{tpu_custom_call.1} parent=1 // pred_fallthru
      _
    // Predicated region
    $region6: #{tpu_custom_call.1} parent=1 // pred_check
      _
    $region7: #{tpu_custom_call.1} parent=1 // pred_check_branch
      %23 = sbr.rel (0) target = $region9
    $region8: #{tpu_custom_call.1} parent=1 // pred_region
      %s25 = ssub.s32 1024, 1024
      %26 = vsyncadd [#allocation6], %s25
      %s27 = sshll.u32 [#allocation5], 4
      %s28 = int_to_ptr.vmem [resolvable:$true] %s27
      %33 = dma.hbm_to_vmem [thread:$0]  %s1, 1024, %s28, [#allocation6], 64, 64, 4
    $region9: #{tpu_custom_call.1} parent=1 // pred_fallthru
      _
    // Predicated region
    $region10: #{tpu_custom_call.1} parent=1 // pred_check
      _
    $region11: #{tpu_custom_call.1} parent=1 // pred_check_branch
      %35 = sbr.rel (0) target = $region13
    $region12: #{tpu_custom_call.1} parent=1 // pred_region
      %36 = dma.done [#allocation3], 1024
    $region13: #{tpu_custom_call.1} parent=1 // pred_fallthru
      _
    // Predicated region
    $region14: #{tpu_custom_call.1} parent=1 // pred_check
      _
    $region15: #{tpu_custom_call.1} parent=1 // pred_check_branch
      %38 = sbr.rel (0) target = $region17
    $region16: #{tpu_custom_call.1} parent=1 // pred_region
      %39 = dma.done [#allocation6], 1024
    $region17: #{tpu_custom_call.1} parent=1 // pred_fallthru
      _
    %v41 = vld [vmem:[#allocation2] sm:$0xf]
    %v42 = vld [vmem:[#allocation2 + $0x4] sm:$0xf]
    %v43 = vld [vmem:[#allocation2 + $0x8] sm:$0xf]
    %v44 = vld [vmem:[#allocation2 + $0xc] sm:$0xf]
    %v45 = vld [vmem:[#allocation2 + $0x10] sm:$0xf]
    %v46 = vld [vmem:[#allocation2 + $0x14] sm:$0xf]
    %v47 = vld [vmem:[#allocation2 + $0x18] sm:$0xf]
    %v48 = vld [vmem:[#allocation2 + $0x1c] sm:$0xf]
    %v49 = vld [vmem:[#allocation2 + $0x20] sm:$0xf]
    %v50 = vld [vmem:[#allocation2 + $0x24] sm:$0xf]
    %v51 = vld [vmem:[#allocation2 + $0x28] sm:$0xf]
    %v52 = vld [vmem:[#allocation2 + $0x2c] sm:$0xf]
    %v53 = vld [vmem:[#allocation2 + $0x30] sm:$0xf]
    %v54 = vld [vmem:[#allocation2 + $0x34] sm:$0xf]
    %v55 = vld [vmem:[#allocation2 + $0x38] sm:$0xf]
    %v56 = vld [vmem:[#allocation2 + $0x3c] sm:$0xf]
    %v57 = vld [vmem:[#allocation5] sm:$0xf]
    %v58 = vld [vmem:[#allocation5 + $0x4] sm:$0xf]
    %v59 = vld [vmem:[#allocation5 + $0x8] sm:$0xf]
    %v60 = vld [vmem:[#allocation5 + $0xc] sm:$0xf]
    %v61 = vld [vmem:[#allocation5 + $0x10] sm:$0xf]
    %v62 = vld [vmem:[#allocation5 + $0x14] sm:$0xf]
    %v63 = vld [vmem:[#allocation5 + $0x18] sm:$0xf]
    %v64 = vld [vmem:[#allocation5 + $0x1c] sm:$0xf]
    %v65 = vld [vmem:[#allocation5 + $0x20] sm:$0xf]
    %v66 = vld [vmem:[#allocation5 + $0x24] sm:$0xf]
    %v67 = vld [vmem:[#allocation5 + $0x28] sm:$0xf]
    %v68 = vld [vmem:[#allocation5 + $0x2c] sm:$0xf]
    %v69 = vld [vmem:[#allocation5 + $0x30] sm:$0xf]
    %v70 = vld [vmem:[#allocation5 + $0x34] sm:$0xf]
    %v71 = vld [vmem:[#allocation5 + $0x38] sm:$0xf]
    %v72 = vld [vmem:[#allocation5 + $0x3c] sm:$0xf]
    %v89 = vunpack.c.l.b16 %v41
    %v90 = vunpack.c.l.b16 %v42
    %v91 = vunpack.c.l.b16 %v43
    %v92 = vunpack.c.l.b16 %v44
    %v93 = vunpack.c.l.b16 %v45
    %v94 = vunpack.c.l.b16 %v46
    %v95 = vunpack.c.l.b16 %v47
    %v96 = vunpack.c.l.b16 %v48
    %v97 = vunpack.c.l.b16 %v49
    %v98 = vunpack.c.l.b16 %v50
    %v99 = vunpack.c.l.b16 %v51
    %v100 = vunpack.c.l.b16 %v52
    %v101 = vunpack.c.l.b16 %v53
    %v102 = vunpack.c.l.b16 %v54
    %v103 = vunpack.c.l.b16 %v55
    %v104 = vunpack.c.l.b16 %v56
    %v105 = vpack.c.b16 %v90, %v89
    %v106 = vpack.c.b16 %v92, %v91
    %v107 = vpack.c.b16 %v94, %v93
    %v108 = vpack.c.b16 %v96, %v95
    %v109 = vpack.c.b16 %v98, %v97
    %v110 = vpack.c.b16 %v100, %v99
    %v111 = vpack.c.b16 %v102, %v101
    %v112 = vpack.c.b16 %v104, %v103
    %v137 = vunpack.c.l.b16 %v57
    %v138 = vunpack.c.l.b16 %v58
    %v139 = vunpack.c.l.b16 %v59
    %v140 = vunpack.c.l.b16 %v60
    %v141 = vunpack.c.l.b16 %v61
    %v142 = vunpack.c.l.b16 %v62
    %v143 = vunpack.c.l.b16 %v63
    %v144 = vunpack.c.l.b16 %v64
    %v145 = vunpack.c.l.b16 %v65
    %v146 = vunpack.c.l.b16 %v66
    %v147 = vunpack.c.l.b16 %v67
    %v148 = vunpack.c.l.b16 %v68
    %v149 = vunpack.c.l.b16 %v69
    %v150 = vunpack.c.l.b16 %v70
    %v151 = vunpack.c.l.b16 %v71
    %v152 = vunpack.c.l.b16 %v72
    %v153 = vpack.c.b16 %v138, %v137
    %v154 = vpack.c.b16 %v140, %v139
    %v155 = vpack.c.b16 %v142, %v141
    %v156 = vpack.c.b16 %v144, %v143
    %v157 = vpack.c.b16 %v146, %v145
    %v158 = vpack.c.b16 %v148, %v147
    %v159 = vpack.c.b16 %v150, %v149
    %v160 = vpack.c.b16 %v152, %v151
    %169 = vmatprep.subr.bf16.mxu0 0
    %170 = vmatpush1.bf16.msra.mxu0 %v160
    %171 = vmatprep.subr.bf16.mxu0 0
    %172 = vmatpush1.bf16.msra.mxu0 %v159
    %173 = vmatprep.subr.bf16.mxu0 0
    %174 = vmatpush1.bf16.msra.mxu0 %v158
    %175 = vmatprep.subr.bf16.mxu0 0
    %176 = vmatpush1.bf16.msra.mxu0 %v157
    %177 = vmatprep.subr.bf16.mxu0 0
    %178 = vmatpush1.bf16.msra.mxu0 %v156
    %179 = vmatprep.subr.bf16.mxu0 0
    %180 = vmatpush1.bf16.msra.mxu0 %v155
    %181 = vmatprep.subr.bf16.mxu0 0
    %182 = vmatpush1.bf16.msra.mxu0 %v154
    %183 = vmatprep.subr.bf16.mxu0 0
    %184 = vmatpush1.bf16.msra.mxu0 %v153
    %185 = vmatprep.subr.bf16.mxu0 0
    %186 = vmatpush2.bf16.msra.mxu0 0
    %187 = vmatprep.subr.bf16.mxu0 0
    %188 = vmatpush2.bf16.msra.mxu0 0
    %189 = vmatprep.subr.bf16.mxu0 0
    %190 = vmatpush2.bf16.msra.mxu0 0
    %191 = vmatprep.subr.bf16.mxu0 0
    %192 = vmatpush2.bf16.msra.mxu0 0
    %193 = vmatprep.subr.bf16.mxu0 0
    %194 = vmatpush2.bf16.msra.mxu0 0
    %195 = vmatprep.subr.bf16.mxu0 0
    %196 = vmatpush2.bf16.msra.mxu0 0
    %197 = vmatprep.subr.bf16.mxu0 0
    %198 = vmatpush2.bf16.msra.mxu0 0
    %199 = vmatprep.subr.bf16.mxu0 0
    %200 = vmatpush2.bf16.msra.mxu0 0
    %201 = vmatprep.mubr.bf16.mxu0 0
    %202 = vmatmul.mubr.bf16.gmra.mxu0 %v105
    %v203 = vpop.f32.mrf.mxu0
    %v204 = vadd.f32 0.0, %v203
    %v205 = vpop.f32.mrf.mxu0
    %v206 = vpop.f32.mrf.mxu0
    %v207 = vadd.f32 0.0, %v206
    %v208 = vpop.f32.mrf.mxu0
    %209 = vmatprep.mubr.bf16.mxu0 0
    %210 = vmatmul.mubr.bf16.gmra.mxu0 %v106
    %v211 = vpop.f32.mrf.mxu0
    %v212 = vadd.f32 0.0, %v211
    %v213 = vpop.f32.mrf.mxu0
    %v214 = vpop.f32.mrf.mxu0
    %v215 = vadd.f32 0.0, %v214
    %v216 = vpop.f32.mrf.mxu0
    %217 = vmatprep.mubr.bf16.mxu0 0
    %218 = vmatmul.mubr.bf16.gmra.mxu0 %v107
    %v219 = vpop.f32.mrf.mxu0
    %v220 = vadd.f32 0.0, %v219
    %v221 = vpop.f32.mrf.mxu0
    %v222 = vpop.f32.mrf.mxu0
    %v223 = vadd.f32 0.0, %v222
    %v224 = vpop.f32.mrf.mxu0
    %225 = vmatprep.mubr.bf16.mxu0 0
    %226 = vmatmul.mubr.bf16.gmra.mxu0 %v108
    %v227 = vpop.f32.mrf.mxu0
    %v228 = vadd.f32 0.0, %v227
    %v229 = vpop.f32.mrf.mxu0
    %v230 = vpop.f32.mrf.mxu0
    %v231 = vadd.f32 0.0, %v230
    %v232 = vpop.f32.mrf.mxu0
    %233 = vmatprep.mubr.bf16.mxu0 0
    %234 = vmatmul.mubr.bf16.gmra.mxu0 %v109
    %v235 = vpop.f32.mrf.mxu0
    %v236 = vadd.f32 0.0, %v235
    %v237 = vpop.f32.mrf.mxu0
    %v238 = vpop.f32.mrf.mxu0
    %v239 = vadd.f32 0.0, %v238
    %v240 = vpop.f32.mrf.mxu0
    %241 = vmatprep.mubr.bf16.mxu0 0
    %242 = vmatmul.mubr.bf16.gmra.mxu0 %v110
    %v243 = vpop.f32.mrf.mxu0
    %v244 = vadd.f32 0.0, %v243
    %v245 = vpop.f32.mrf.mxu0
    %v246 = vpop.f32.mrf.mxu0
    %v247 = vadd.f32 0.0, %v246
    %v248 = vpop.f32.mrf.mxu0
    %249 = vmatprep.mubr.bf16.mxu0 0
    %250 = vmatmul.mubr.bf16.gmra.mxu0 %v111
    %v251 = vpop.f32.mrf.mxu0
    %v252 = vadd.f32 0.0, %v251
    %v253 = vpop.f32.mrf.mxu0
    %v254 = vpop.f32.mrf.mxu0
    %v255 = vadd.f32 0.0, %v254
    %v256 = vpop.f32.mrf.mxu0
    %257 = vmatprep.mubr.bf16.mxu0 0
    %258 = vmatmul.mubr.bf16.gmra.mxu0 %v112
    %v259 = vpop.f32.mrf.mxu0
    %v260 = vadd.f32 0.0, %v259
    %v261 = vpop.f32.mrf.mxu0
    %v262 = vpop.f32.mrf.mxu0
    %v263 = vadd.f32 0.0, %v262
    %v264 = vpop.f32.mrf.mxu0
    %265 = vdwg.mxu0
    %v266 = vpack.c.bf16 %v207, %v204
    %v267 = vpack.c.bf16 %v215, %v212
    %v268 = vpack.c.bf16 %v223, %v220
    %v269 = vpack.c.bf16 %v231, %v228
    %v270 = vpack.c.bf16 %v239, %v236
    %v271 = vpack.c.bf16 %v247, %v244
    %v272 = vpack.c.bf16 %v255, %v252
    %v273 = vpack.c.bf16 %v263, %v260
    %v282 = vunpack.c.l.b16 %v266
    %v283 = vunpack.c.h.b16 %v266
    %v284 = vunpack.c.l.b16 %v267
    %v285 = vunpack.c.h.b16 %v267
    %v286 = vunpack.c.l.b16 %v268
    %v287 = vunpack.c.h.b16 %v268
    %v288 = vunpack.c.l.b16 %v269
    %v289 = vunpack.c.h.b16 %v269
    %v290 = vunpack.c.l.b16 %v270
    %v291 = vunpack.c.h.b16 %v270
    %v292 = vunpack.c.l.b16 %v271
    %v293 = vunpack.c.h.b16 %v271
    %v294 = vunpack.c.l.b16 %v272
    %v295 = vunpack.c.h.b16 %v272
    %v296 = vunpack.c.l.b16 %v273
    %v297 = vunpack.c.h.b16 %v273
    %v298 = vpack.c.b16 %v282, %v282
    %v299 = vpack.c.b16 %v283, %v283
    %v300 = vpack.c.b16 %v284, %v284
    %v301 = vpack.c.b16 %v285, %v285
    %v302 = vpack.c.b16 %v286, %v286
    %v303 = vpack.c.b16 %v287, %v287
    %v304 = vpack.c.b16 %v288, %v288
    %v305 = vpack.c.b16 %v289, %v289
    %v306 = vpack.c.b16 %v290, %v290
    %v307 = vpack.c.b16 %v291, %v291
    %v308 = vpack.c.b16 %v292, %v292
    %v309 = vpack.c.b16 %v293, %v293
    %v310 = vpack.c.b16 %v294, %v294
    %v311 = vpack.c.b16 %v295, %v295
    %v312 = vpack.c.b16 %v296, %v296
    %v313 = vpack.c.b16 %v297, %v297
    %330 = vst [vmem:[#allocation7] sm:$0xf] %v298
    %331 = vst [vmem:[#allocation7 + $0x4] sm:$0xf] %v299
    %332 = vst [vmem:[#allocation7 + $0x8] sm:$0xf] %v300
    %333 = vst [vmem:[#allocation7 + $0xc] sm:$0xf] %v301
    %334 = vst [vmem:[#allocation7 + $0x10] sm:$0xf] %v302
    %335 = vst [vmem:[#allocation7 + $0x14] sm:$0xf] %v303
    %336 = vst [vmem:[#allocation7 + $0x18] sm:$0xf] %v304
    %337 = vst [vmem:[#allocation7 + $0x1c] sm:$0xf] %v305
    %338 = vst [vmem:[#allocation7 + $0x20] sm:$0xf] %v306
    %339 = vst [vmem:[#allocation7 + $0x24] sm:$0xf] %v307
    %340 = vst [vmem:[#allocation7 + $0x28] sm:$0xf] %v308
    %341 = vst [vmem:[#allocation7 + $0x2c] sm:$0xf] %v309
    %342 = vst [vmem:[#allocation7 + $0x30] sm:$0xf] %v310
    %343 = vst [vmem:[#allocation7 + $0x34] sm:$0xf] %v311
    %344 = vst [vmem:[#allocation7 + $0x38] sm:$0xf] %v312
    %345 = vst [vmem:[#allocation7 + $0x3c] sm:$0xf] %v313
    // Predicated region
    $region18: #{tpu_custom_call.1} parent=1 // pred_check
      _
    $region19: #{tpu_custom_call.1} parent=1 // pred_check_branch
      %347 = sbr.rel (0) target = $region21
    $region20: #{tpu_custom_call.1} parent=1 // pred_region
      %s349 = ssub.s32 1024, 1024
      %350 = vsyncadd [#allocation4], %s349
      %s351 = sshll.u32 [#allocation7], 4
      %s352 = int_to_ptr.vmem [resolvable:$true] %s351
      %357 = dma.vmem_to_hbm [thread:$0]  %s352, 1024, %s2, [#allocation4], 64, 64, 4
    $region21: #{tpu_custom_call.1} parent=1 // pred_fallthru
      _
    // Predicated region
    $region22: #{tpu_custom_call.1} parent=1 // pred_check
      _
    $region23: #{tpu_custom_call.1} parent=1 // pred_check_branch
      %359 = sbr.rel (0) target = $region25
    $region24: #{tpu_custom_call.1} parent=1 // pred_region
      %360 = dma.done [#allocation4], 1024
    $region25: #{tpu_custom_call.1} parent=1 // pred_fallthru
      _
    %361 = vsyncpa [#allocation3], 1
    %362 = vsyncpa [#allocation6], 1
    %363 = vsyncpa [#allocation4], 1

</llo_original>
